<compile_context>
chip_gen: v6e
topology: v6e:2x2x1
jax: 0.10.0
libtpu: 0.0.40
codegen_flags: <defaults>
</compile_context>

<pallas_src>
import functools

import jax
import jax.numpy as jnp
from jax.experimental import pallas as pl
from jax.experimental.pallas import tpu as pltpu


# ~2 MiB per x/out tile: big enough to sit near the HBM roofline on
# v5e/v6e/v7x, small enough that the double-buffered footprint stays well
# under the 16 MiB (v5e) scoped-VMEM default and v7x's 64 MiB physical VMEM.
_TARGET_TILE_BYTES = 2 << 20


def _pe_add_kernel(x_ref, pe_ref, o_ref, *, mult):
    # x_ref/o_ref: (TB, TF); pe_ref: (1, TF) -> broadcast add over batch.
    # Compute stays in the input dtype (bf16 stays bf16, f32 stays f32).
    o_ref[...] = (x_ref[...] + pe_ref[...] * mult).astype(o_ref.dtype)


def _pe_add_dropout_kernel(x_ref, pe_ref, bits_ref, o_ref, *,
                           mult, threshold, scale):
    y = x_ref[...] + pe_ref[...] * mult
    # Integer-threshold dropout: drop iff bits < round(p * 2**32).
    keep = bits_ref[...] >= jnp.uint32(threshold)
    o_ref[...] = jnp.where(keep, y * scale, jnp.zeros_like(y)).astype(o_ref.dtype)


def _pick_flat_tile(flat, max_elems):
    """Largest multiple of 128 dividing `flat` that is <= max_elems (else flat)."""
    if flat % 128 != 0 or flat <= max_elems:
        return flat
    start = max(128, (max_elems // 128) * 128)
    for cand in range(start, 127, -128):
        if flat % cand == 0:
            return cand
    return flat


def learned_positional_encoding(x, pe, *, mult=1.0, dropout_p=0.1,
                                training=False, rng=None,
                                batch_tile=None, flat_tile=None):
    """x: (B, S, D); pe: (1, max_len, D) with max_len >= S."""
    B, S, D = x.shape
    assert pe.shape[0] == 1 and pe.shape[2] == D and pe.shape[1] >= S

    itemsize = jnp.dtype(x.dtype).itemsize
    flat = S * D

    # Lane-dense layout: flatten (S, D) so the minor dim is a large multiple
    # of 128 (or the full extent) -> unmasked vst, efficient DMA.
    x2 = x.reshape(B, flat)
    pe2 = pe[:, :S, :].astype(x.dtype).reshape(1, flat)

    # --- tile selection -----------------------------------------------------
    if batch_tile is None:
        if B % 8 == 0:
            batch_tile = 8
            while (B % (batch_tile * 2) == 0
                   and batch_tile * 2 * flat * itemsize <= _TARGET_TILE_BYTES):
                batch_tile *= 2
        else:
            batch_tile = B  # full-extent batch block keeps the (8,128) rule
    if flat_tile is None:
        row_budget = max(128, (_TARGET_TILE_BYTES // itemsize) // batch_tile)
        flat_tile = _pick_flat_tile(flat, row_budget)
    assert B % batch_tile == 0 and flat % flat_tile == 0

    nf, nb = flat // flat_tile, B // batch_tile
    use_dropout = bool(training) and float(dropout_p) > 0.0

    # --- specs ---------------------------------------------------------------
    x_spec = pl.BlockSpec((batch_tile, flat_tile), lambda f, b: (b, f))
    pe_spec = pl.BlockSpec((1, flat_tile), lambda f, b: (0, f))  # const over b
    out_spec = pl.BlockSpec((batch_tile, flat_tile), lambda f, b: (b, f))

    in_specs = [x_spec, pe_spec]
    args = [x2, pe2]

    if use_dropout:
        if rng is None:
            rng = jax.random.PRNGKey(0)
        # TODO(synk): on real TPU hardware generate the mask in-kernel with
        # pltpu.prng_seed / pltpu.prng_random_bits to avoid streaming the bits
        # from HBM; host-side jax.random keeps the kernel runnable under the
        # CPU interpreter as well.
        bits = jax.random.bits(rng, (B, flat), dtype=jnp.uint32)
        in_specs.append(pl.BlockSpec((batch_tile, flat_tile), lambda f, b: (b, f)))
        args.append(bits)
        threshold = min(int(round(float(dropout_p) * 2.0 ** 32)), 2 ** 32 - 1)
        kernel = functools.partial(
            _pe_add_dropout_kernel, mult=float(mult), threshold=threshold,
            scale=1.0 / (1.0 - float(dropout_p)))
    else:
        kernel = functools.partial(_pe_add_kernel, mult=float(mult))

    # --- compiler params / cost hint -----------------------------------------
    tile_b = batch_tile * flat_tile * itemsize
    bits_b = batch_tile * flat_tile * 4 if use_dropout else 0
    needed = 2 * (2 * tile_b + flat_tile * itemsize + bits_b)  # double-buffered
    vmem_limit = int(min(max(needed + (4 << 20), 16 << 20), 48 << 20))

    bytes_accessed = (2 * x2.size * itemsize + pe2.size * itemsize
                      + (B * flat * 4 if use_dropout else 0))
    cost = pl.CostEstimate(flops=3 * B * flat, transcendentals=0,
                           bytes_accessed=bytes_accessed)

    out2 = pl.pallas_call(
        kernel,
        out_shape=jax.ShapeDtypeStruct((B, flat), x.dtype),
        grid=(nf, nb),              # flat tiles outer, batch inner -> the pe
        in_specs=in_specs,          # tile index is constant across the inner
        out_specs=out_spec,         # axis and is DMA'd only once per flat tile
        compiler_params=pltpu.CompilerParams(
            dimension_semantics=("parallel", "arbitrary"),
            vmem_limit_bytes=vmem_limit),
        cost_estimate=cost,
    )(*args)
    return out2.reshape(B, S, D)


if __name__ == "__main__":
    # Module hyperparameters (synthetic, deterministic init).
    d_model = 32
    max_len = 16
    mult = 2.0
    dropout_p = 0.1

    key = jax.random.PRNGKey(0)
    k_pe, k_x, k_drop = jax.random.split(key, 3)

    # pe = randn(1, max_len, d_model) / mult  (matches the PyTorch init)
    pe = (jax.random.normal(k_pe, (1, max_len, d_model), dtype=jnp.float32)
          / jnp.float32(mult))

    B, S = 2, 8
    x = jax.random.normal(k_x, (B, S, d_model), dtype=jnp.float32)

    # Eval mode: dropout is the identity -> deterministic, checkable.
    out = learned_positional_encoding(
        x, pe, mult=mult, dropout_p=dropout_p, training=False)
    out = jax.block_until_ready(out)

    ref = x + pe[:, :S, :] * jnp.float32(mult)
    assert out.shape == (B, S, d_model)
    assert jnp.allclose(out, ref, atol=1e-5, rtol=1e-5)

    # Training mode: every element must be either dropped (0) or ref / (1-p).
    out_train = learned_positional_encoding(
        x, pe, mult=mult, dropout_p=dropout_p, training=True, rng=k_drop)
    out_train = jax.block_until_ready(out_train)
    kept = jnp.isclose(out_train, ref / (1.0 - dropout_p), atol=1e-5, rtol=1e-5)
    dropped = jnp.isclose(out_train, 0.0, atol=1e-6)
    assert bool(jnp.all(kept | dropped))

    print("KERNEL_OK")
</pallas_src>

<mosaic_0001>
module attributes {stable_mosaic.version = 11 : i64} {
  func.func @_pe_add_kernel(%arg0: i32, %arg1: i32, %arg2: memref<2x256xf32, #tpu.memory_space<vmem>>, %arg3: memref<1x256xf32, #tpu.memory_space<vmem>>, %arg4: memref<2x256xf32, #tpu.memory_space<vmem>>) attributes {dimension_semantics = [#tpu.dimension_semantics<parallel>, #tpu.dimension_semantics<arbitrary>], iteration_bounds = array<i64: 1, 1>, scalar_prefetch = 0 : i64, scratch_operands = 0 : i64, tpu.core_type = #tpu.core_type<tc>, window_params = [{transform_indices = @transform_0, window_bounds = array<i64: 2, 256>}, {transform_indices = @transform_1, window_bounds = array<i64: 1, 256>}, {transform_indices = @transform_2, window_bounds = array<i64: 2, 256>}]} {
    %c0 = arith.constant 0 : index
    %c0_0 = arith.constant 0 : index
    %0 = vector.load %arg2[%c0, %c0_0] : memref<2x256xf32, #tpu.memory_space<vmem>>, vector<2x256xf32>
    %c0_1 = arith.constant 0 : index
    %c0_2 = arith.constant 0 : index
    %1 = vector.load %arg3[%c0_1, %c0_2] : memref<1x256xf32, #tpu.memory_space<vmem>>, vector<1x256xf32>
    %cst = arith.constant 2.000000e+00 : f32
    %2 = vector.broadcast %cst : f32 to vector<1x256xf32>
    %3 = arith.mulf %1, %2 : vector<1x256xf32>
    %4 = vector.broadcast %3 : vector<1x256xf32> to vector<2x256xf32>
    %5 = arith.addf %0, %4 : vector<2x256xf32>
    %c0_3 = arith.constant 0 : index
    %c0_4 = arith.constant 0 : index
    %6 = vector.load %arg4[%c0_3, %c0_4] : memref<2x256xf32, #tpu.memory_space<vmem>>, vector<2x256xf32>
    tpu.vector_store %arg4[%c0_3, %c0_4], %5 {strides = array<i32>} : memref<2x256xf32, #tpu.memory_space<vmem>>, vector<2x256xf32>,
    return
  }
  func.func @transform_0(%arg0: i32, %arg1: i32) -> (i32, i32) {
    %c0_i32 = arith.constant 0 : i32
    return %arg1, %arg0 : i32, i32
  }
  func.func @transform_1(%arg0: i32, %arg1: i32) -> (i32, i32) {
    %c0_i32 = arith.constant 0 : i32
    %c0_i32_0 = arith.constant 0 : i32
    return %c0_i32, %arg0 : i32, i32
  }
  func.func @transform_2(%arg0: i32, %arg1: i32) -> (i32, i32) {
    %c0_i32 = arith.constant 0 : i32
    return %arg1, %arg0 : i32, i32
  }
}

</mosaic_0001>

<llo_original>
// kernel: tpu_custom_call.1
$region0: #{tpu_custom_call.1}
  #allocation0 [shape = 'u32[]', space=smem, size = 0x4, offset = 0x4, fixed_abs, tag = 'smem constant byte address 0x4 - core index']
  #allocation1 [shape = 'u32[144,128]{1,0:T(1,128)}', space=vmem, size = 0x12000, scoped, tag = 'internal scratch']
  %s0 = inlined_call_operand.hbm [shape: f32[2,256], index: 0, kind: input, shape index: {}]
  %s1 = inlined_call_operand.hbm [shape: f32[1,256], index: 1, kind: input, shape index: {}]
  %s2 = inlined_call_operand.hbm [shape: f32[2,256], index: 2, kind: output, shape index: {}]
  %s3 = sld [smem:[#allocation0]]
  $region26: #{tpu_custom_call.1} parent=0
    _
  %s5 = ssub.s32 1, %s3
  %s6 = scalar_select 0, %s5, %s3
  $region1: #{tpu_custom_call.1} parent=0
    #allocation2 [shape = 'u8[2048]{0}', space=vmem, size = 0x800, scoped, tag = 'input window, operand 0, single buffered']
    #allocation3 [shape = 's32[1]{0}', space=sflag, size = 0x4, scoped, tag = 'scoped memory for tpu_custom_call.1']
    #allocation4 [shape = 's32[1]{0}', space=sflag, size = 0x4, scoped, tag = 'scoped memory for tpu_custom_call.1']
    #allocation5 [shape = 'u8[1024]{0}', space=vmem, size = 0x400, scoped, tag = 'input window, operand 1, single buffered']
    #allocation6 [shape = 's32[1]{0}', space=sflag, size = 0x4, scoped, tag = 'scoped memory for tpu_custom_call.1']
    #allocation7 [shape = 'u8[2048]{0}', space=vmem, size = 0x800, scoped, tag = 'output window, operand 0, single buffered']
    %7 = vsyncpa [#allocation3], 0
    %8 = vsyncpa [#allocation6], 0
    %9 = vsyncpa [#allocation4], 0
    // Predicated region
    $region2: #{tpu_custom_call.1} parent=1 // pred_check
      _
    $region3: #{tpu_custom_call.1} parent=1 // pred_check_branch
      %11 = sbr.rel (0) target = $region5
    $region4: #{tpu_custom_call.1} parent=1 // pred_region
      %s13 = ssub.s32 64, 64
      %14 = vsyncadd [#allocation3], %s13
      %s16 = sshll.u32 [#allocation2], 4
      %s17 = int_to_ptr.vmem [resolvable:$true] %s16
      %19 = dma.hbm_to_vmem [thread:$0]  %s0, 64, %s17, [#allocation3]
    $region5: #{tpu_custom_call.1} parent=1 // pred_fallthru
      _
    // Predicated region
    $region6: #{tpu_custom_call.1} parent=1 // pred_check
      _
    $region7: #{tpu_custom_call.1} parent=1 // pred_check_branch
      %21 = sbr.rel (0) target = $region9
    $region8: #{tpu_custom_call.1} parent=1 // pred_region
      %s23 = ssub.s32 32, 32
      %24 = vsyncadd [#allocation6], %s23
      %s26 = sshll.u32 [#allocation5], 4
      %s27 = int_to_ptr.vmem [resolvable:$true] %s26
      %29 = dma.hbm_to_vmem [thread:$0]  %s1, 32, %s27, [#allocation6]
    $region9: #{tpu_custom_call.1} parent=1 // pred_fallthru
      _
    // Predicated region
    $region10: #{tpu_custom_call.1} parent=1 // pred_check
      _
    $region11: #{tpu_custom_call.1} parent=1 // pred_check_branch
      %31 = sbr.rel (0) target = $region13
    $region12: #{tpu_custom_call.1} parent=1 // pred_region
      %32 = dma.done [#allocation3], 64
    $region13: #{tpu_custom_call.1} parent=1 // pred_fallthru
      _
    // Predicated region
    $region14: #{tpu_custom_call.1} parent=1 // pred_check
      _
    $region15: #{tpu_custom_call.1} parent=1 // pred_check_branch
      %34 = sbr.rel (0) target = $region17
    $region16: #{tpu_custom_call.1} parent=1 // pred_region
      %35 = dma.done [#allocation6], 32
    $region17: #{tpu_custom_call.1} parent=1 // pred_fallthru
      _
    %v36 = vld [vmem:[#allocation2] sm:$0xf]
    %v37 = vld [vmem:[#allocation5] sm:$0x3]
    %v38 = vmul.f32 %v37, 2.0
    %v40 = vlaneseq
    %v41 = vshrl.u32 %v40, 7
    %v42 = vsub.s32 0, %v41
    %v43 = vrot.slane %v38, %v42
    %v44 = vlaneseq
    %v45 = vshrl.u32 %v44, 7
    %v46 = vsub.s32 1, %v45
    %v47 = vrot.slane %v38, %v46
    %v48 = vcombine.low %v43, %v47
    %v50 = vunpack.c.l.s4 1983009808
    %v51 = vunpack.c.0.s8 %v50
    %v52 = vlaneseq
    %v53 = vshrl.u32 %v52, 7
    %v54 = vsub.s32 %v51, %v53
    %v55 = vrot.slane %v48, %v54
    %v57 = vadd.f32 %v36, %v55
    %58 = vst [vmem:[#allocation7] sm:$0xf] %v57
    // Predicated region
    $region18: #{tpu_custom_call.1} parent=1 // pred_check
      _
    $region19: #{tpu_custom_call.1} parent=1 // pred_check_branch
      %60 = sbr.rel (0) target = $region21
    $region20: #{tpu_custom_call.1} parent=1 // pred_region
      %s62 = ssub.s32 64, 64
      %63 = vsyncadd [#allocation4], %s62
      %s65 = sshll.u32 [#allocation7], 4
      %s66 = int_to_ptr.vmem [resolvable:$true] %s65
      %68 = dma.vmem_to_hbm [thread:$0]  %s66, 64, %s2, [#allocation4]
    $region21: #{tpu_custom_call.1} parent=1 // pred_fallthru
      _
    // Predicated region
    $region22: #{tpu_custom_call.1} parent=1 // pred_check
      _
    $region23: #{tpu_custom_call.1} parent=1 // pred_check_branch
      %70 = sbr.rel (0) target = $region25
    $region24: #{tpu_custom_call.1} parent=1 // pred_region
      %71 = dma.done [#allocation4], 64
    $region25: #{tpu_custom_call.1} parent=1 // pred_fallthru
      _
    %72 = vsyncpa [#allocation3], 1
    %73 = vsyncpa [#allocation6], 1
    %74 = vsyncpa [#allocation4], 1

</llo_original>
